<compile_context>
chip_gen: v5e
topology: v5e:2x2
jax: 0.10.0
libtpu: 0.0.40
codegen_flags: <defaults>
</compile_context>

<pallas_src>
import functools

import jax
import jax.numpy as jnp
from jax.experimental import pallas as pl
from jax.experimental.pallas import tpu as pltpu


def _round_up(n, m):
    return ((n + m - 1) // m) * m


def _cdiv(a, b):
    return (a + b - 1) // b


def _policy_kernel(x_ref, w_enc_ref, b_enc_ref, w_pol_ref, b_pol_ref, out_ref):
    # encoder: Linear + bias + ReLU (all f32, f32 accumulation on the MXU)
    h = jnp.dot(x_ref[...], w_enc_ref[...], preferred_element_type=jnp.float32)
    h = jnp.maximum(h + b_enc_ref[...], 0.0)
    # policy head: Linear
    out = jnp.dot(h, w_pol_ref[...], preferred_element_type=jnp.float32)
    out_ref[...] = (out + b_pol_ref[...]).astype(out_ref.dtype)


def prepare_params(w_enc, b_enc, w_pol, b_pol):
    """One-time (per parameter update) padding of the encoder hidden dim to a
    multiple of 128.  Zero padding is math-preserving: zero hidden columns give
    ReLU(0)=0 activations that meet zero rows of w_pol.  Hoisted out of the
    per-forward path so no padding/copy work happens per call."""
    IN, HID = w_enc.shape
    NUM_OPS = w_pol.shape[1]
    HID_P = _round_up(HID, 128)
    w_enc_p = jnp.zeros((IN, HID_P), jnp.float32).at[:, :HID].set(
        w_enc.astype(jnp.float32))
    b_enc_p = jnp.zeros((1, HID_P), jnp.float32).at[:, :HID].set(
        jnp.reshape(b_enc, (1, HID)).astype(jnp.float32))
    w_pol_p = jnp.zeros((HID_P, NUM_OPS), jnp.float32).at[:HID, :].set(
        w_pol.astype(jnp.float32))
    b_pol_p = jnp.reshape(b_pol, (1, NUM_OPS)).astype(jnp.float32)
    return w_enc_p, b_enc_p, w_pol_p, b_pol_p


@functools.partial(jax.jit, static_argnames=("tile_b",))
def policy_forward(x, w_enc_p, b_enc_p, w_pol_p, b_pol_p, *, tile_b=4096):
    """Fused encoder + policy-head forward.

    x:       (B, in_features)           float32  (used as-is, no copy)
    w_enc_p: (in_features, hidden_pad)  float32  (from prepare_params)
    b_enc_p: (1, hidden_pad)            float32
    w_pol_p: (hidden_pad, num_ops)      float32
    b_pol_p: (1, num_ops)               float32
    returns  (B, num_ops)               float32
    """
    B, IN = x.shape
    HID_P = w_enc_p.shape[1]
    NUM_OPS = w_pol_p.shape[1]

    cost = pl.CostEstimate(
        flops=2 * B * (IN * HID_P + HID_P * NUM_OPS),
        transcendentals=0,
        bytes_accessed=4 * (x.size + w_enc_p.size + b_enc_p.size
                            + w_pol_p.size + b_pol_p.size + B * NUM_OPS),
    )
    out_shape = jax.ShapeDtypeStruct((B, NUM_OPS), jnp.float32)

    if B <= 512:
        # Genuinely tiny batch: single grid-less invocation, everything in VMEM.
        return pl.pallas_call(
            _policy_kernel,
            out_shape=out_shape,
            cost_estimate=cost,
        )(x, w_enc_p, b_enc_p, w_pol_p, b_pol_p)

    # At least 2 balanced batch tiles so "parallel" can shard across both
    # TensorCores on v7x; tb is a multiple of 8 (sublane) and the last block
    # may be partial (Pallas masks the boundary: OOB reads unused, OOB writes
    # dropped), so no padded copy of x is ever materialized.
    nb = max(2, _cdiv(B, tile_b))
    tb = _round_up(_cdiv(B, nb), 8)
    nb = _cdiv(B, tb)

    grid_spec = pl.GridSpec(
        grid=(nb,),
        in_specs=[
            pl.BlockSpec((tb, IN), lambda i: (i, 0)),         # activation tile
            pl.BlockSpec((IN, HID_P), lambda i: (0, 0)),      # resident weights
            pl.BlockSpec((1, HID_P), lambda i: (0, 0)),
            pl.BlockSpec((HID_P, NUM_OPS), lambda i: (0, 0)),
            pl.BlockSpec((1, NUM_OPS), lambda i: (0, 0)),
        ],
        out_specs=pl.BlockSpec((tb, NUM_OPS), lambda i: (i, 0)),
    )
    return pl.pallas_call(
        _policy_kernel,
        out_shape=out_shape,
        grid_spec=grid_spec,
        compiler_params=pltpu.CompilerParams(
            dimension_semantics=("parallel",)),   # megacore sharding on v7x
        cost_estimate=cost,
    )(x, w_enc_p, b_enc_p, w_pol_p, b_pol_p)


def init_params(key, in_features, out_features, num_ops):
    """Deterministic synthetic parameter init (PyTorch-Linear-like scale),
    stored already transposed to (in, out)."""
    k1, k2, k3, k4 = jax.random.split(key, 4)
    lim_enc = 1.0 / float(in_features) ** 0.5
    lim_pol = 1.0 / float(out_features) ** 0.5
    w_enc = jax.random.uniform(k1, (in_features, out_features),
                               jnp.float32, -lim_enc, lim_enc)
    b_enc = jax.random.uniform(k2, (1, out_features),
                               jnp.float32, -lim_enc, lim_enc)
    w_pol = jax.random.uniform(k3, (out_features, num_ops),
                               jnp.float32, -lim_pol, lim_pol)
    b_pol = jax.random.uniform(k4, (1, num_ops),
                               jnp.float32, -lim_pol, lim_pol)
    return w_enc, b_enc, w_pol, b_pol


def _reference(x, w_enc_p, b_enc_p, w_pol_p, b_pol_p):
    """Pure-JAX f32 reference (same padded params, identical math)."""
    h = jnp.maximum(x @ w_enc_p + b_enc_p, 0.0)
    return h @ w_pol_p + b_pol_p


if __name__ == "__main__":
    # Small shapes consistent with the module's forward:
    #   batch=8, in_features=32, encoder.out_features=64, num_ops=16
    B, IN, HID, NUM_OPS = 8, 32, 64, 16

    key = jax.random.PRNGKey(0)
    kx, kp, kx2, kx3 = jax.random.split(key, 4)
    x = jax.random.normal(kx, (B, IN), jnp.float32)
    params = prepare_params(*init_params(kp, IN, HID, NUM_OPS))

    # --- tiny-batch path (grid-less single invocation) ---
    out = jax.block_until_ready(policy_forward(x, *params))
    assert out.shape == (B, NUM_OPS)
    ref = _reference(x, *params)
    assert jnp.allclose(out, ref, atol=2e-2, rtol=2e-2)

    # --- batch-tiled path (>=2 balanced grid steps, "parallel" semantics) ---
    B_BIG = 2048
    x_big = jax.random.normal(kx2, (B_BIG, IN), jnp.float32)
    out_big = jax.block_until_ready(policy_forward(x_big, *params))
    assert out_big.shape == (B_BIG, NUM_OPS)
    assert jnp.allclose(out_big, _reference(x_big, *params), atol=2e-2, rtol=2e-2)

    # --- batch-tiled path with a partial trailing block (boundary masking) ---
    B_ODD = 1000
    x_odd = jax.random.normal(kx3, (B_ODD, IN), jnp.float32)
    out_odd = jax.block_until_ready(policy_forward(x_odd, *params, tile_b=256))
    assert out_odd.shape == (B_ODD, NUM_OPS)
    assert jnp.allclose(out_odd, _reference(x_odd, *params), atol=2e-2, rtol=2e-2)

    print("KERNEL_OK")
</pallas_src>

<mosaic_0001>
module attributes {stable_mosaic.version = 11 : i64} {
  func.func @_policy_kernel(%arg0: memref<8x32xf32, #tpu.memory_space<vmem>>, %arg1: memref<32x128xf32, #tpu.memory_space<vmem>>, %arg2: memref<1x128xf32, #tpu.memory_space<vmem>>, %arg3: memref<128x16xf32, #tpu.memory_space<vmem>>, %arg4: memref<1x16xf32, #tpu.memory_space<vmem>>, %arg5: memref<8x16xf32, #tpu.memory_space<vmem>>) attributes {dimension_semantics = [], scalar_prefetch = 0 : i64, scratch_operands = 0 : i64, tpu.core_type = #tpu.core_type<tc>} {
    %c0 = arith.constant 0 : index
    %c0_0 = arith.constant 0 : index
    %0 = vector.load %arg0[%c0, %c0_0] : memref<8x32xf32, #tpu.memory_space<vmem>>, vector<8x32xf32>
    %c0_1 = arith.constant 0 : index
    %c0_2 = arith.constant 0 : index
    %1 = vector.load %arg1[%c0_1, %c0_2] : memref<32x128xf32, #tpu.memory_space<vmem>>, vector<32x128xf32>
    %cst = arith.constant dense<0.000000e+00> : vector<8x128xf32>
    %2 = tpu.matmul %0, %1, %cst {dimension_numbers = #tpu.dot_dimension_numbers<[1], [0], [0], [1], [0, 0, 1, 1], [], []>} : vector<8x32xf32>, vector<32x128xf32>, vector<8x128xf32> -> vector<8x128xf32>
    %c0_3 = arith.constant 0 : index
    %c0_4 = arith.constant 0 : index
    %3 = vector.load %arg2[%c0_3, %c0_4] : memref<1x128xf32, #tpu.memory_space<vmem>>, vector<1x128xf32>
    %4 = vector.broadcast %3 : vector<1x128xf32> to vector<8x128xf32>
    %5 = arith.addf %2, %4 : vector<8x128xf32>
    %cst_5 = arith.constant 0.000000e+00 : f32
    %6 = vector.broadcast %cst_5 : f32 to vector<8x128xf32>
    %7 = arith.maximumf %5, %6 : vector<8x128xf32>
    %c0_6 = arith.constant 0 : index
    %c0_7 = arith.constant 0 : index
    %8 = vector.load %arg3[%c0_6, %c0_7] : memref<128x16xf32, #tpu.memory_space<vmem>>, vector<128x16xf32>
    %cst_8 = arith.constant dense<0.000000e+00> : vector<8x16xf32>
    %9 = tpu.matmul %7, %8, %cst_8 {dimension_numbers = #tpu.dot_dimension_numbers<[1], [0], [0], [1], [0, 0, 1, 1], [], []>} : vector<8x128xf32>, vector<128x16xf32>, vector<8x16xf32> -> vector<8x16xf32>
    %c0_9 = arith.constant 0 : index
    %c0_10 = arith.constant 0 : index
    %10 = vector.load %arg4[%c0_9, %c0_10] : memref<1x16xf32, #tpu.memory_space<vmem>>, vector<1x16xf32>
    %11 = vector.broadcast %10 : vector<1x16xf32> to vector<8x16xf32>
    %12 = arith.addf %9, %11 : vector<8x16xf32>
    %c0_11 = arith.constant 0 : index
    %c0_12 = arith.constant 0 : index
    %13 = vector.load %arg5[%c0_11, %c0_12] : memref<8x16xf32, #tpu.memory_space<vmem>>, vector<8x16xf32>
    tpu.vector_store %arg5[%c0_11, %c0_12], %12 {strides = array<i32>} : memref<8x16xf32, #tpu.memory_space<vmem>>, vector<8x16xf32>,
    return
  }
}

</mosaic_0001>

<llo_original>
// kernel: policy_forward.1
$region0: #{policy_forward.1}
  #allocation0 [shape = 'u32[]', space=smem, size = 0x4, offset = 0x4, fixed_abs, tag = 'smem constant byte address 0x4 - core index']
  #allocation1 [shape = 'u32[72,128]{1,0:T(1,128)}', space=vmem, size = 0x9000, scoped, tag = 'internal scratch']
  %s0 = inlined_call_operand.vmem [shape: f32[8,32], index: 0, kind: input, shape index: {}]
  %s1 = inlined_call_operand.vmem [shape: f32[32,128], index: 1, kind: input, shape index: {}]
  %s2 = inlined_call_operand.vmem [shape: f32[1,128], index: 2, kind: input, shape index: {}]
  %s3 = inlined_call_operand.vmem [shape: f32[128,16], index: 3, kind: input, shape index: {}]
  %s4 = inlined_call_operand.vmem [shape: f32[1,16], index: 4, kind: input, shape index: {}]
  %s5 = inlined_call_operand.hbm [shape: f32[8,16], index: 5, kind: output, shape index: {}]
  %s6 = sld [smem:[#allocation0]]
  $region30: #{policy_forward.1} parent=0
    _
  %s8 = ssub.s32 1, %s6
  %s9 = scalar_select 0, %s8, %s6
  $region1: #{policy_forward.1} parent=0
    #allocation2 [shape = 'u8[4096]{0}', space=vmem, size = 0x1000, scoped, tag = 'output window, operand 0, single buffered']
    #allocation3 [shape = 's32[1]{0}', space=sflag, size = 0x4, scoped, tag = 'scoped memory for policy_forward.1']
    %10 = vsyncpa [#allocation3], 0
    // Predicated region
    $region2: #{policy_forward.1} parent=1 // pred_check
      _
    $region3: #{policy_forward.1} parent=1 // pred_check_branch
      %12 = sbr.rel (0) target = $region5
    $region4: #{policy_forward.1} parent=1 // pred_region
      _
    $region5: #{policy_forward.1} parent=1 // pred_fallthru
      _
    // Predicated region
    $region6: #{policy_forward.1} parent=1 // pred_check
      _
    $region7: #{policy_forward.1} parent=1 // pred_check_branch
      %14 = sbr.rel (0) target = $region9
    $region8: #{policy_forward.1} parent=1 // pred_region
      _
    $region9: #{policy_forward.1} parent=1 // pred_fallthru
      _
    // Predicated region
    $region10: #{policy_forward.1} parent=1 // pred_check
      _
    $region11: #{policy_forward.1} parent=1 // pred_check_branch
      %16 = sbr.rel (0) target = $region13
    $region12: #{policy_forward.1} parent=1 // pred_region
      _
    $region13: #{policy_forward.1} parent=1 // pred_fallthru
      _
    // Predicated region
    $region14: #{policy_forward.1} parent=1 // pred_check
      _
    $region15: #{policy_forward.1} parent=1 // pred_check_branch
      %18 = sbr.rel (0) target = $region17
    $region16: #{policy_forward.1} parent=1 // pred_region
      _
    $region17: #{policy_forward.1} parent=1 // pred_fallthru
      _
    // Predicated region
    $region18: #{policy_forward.1} parent=1 // pred_check
      _
    $region19: #{policy_forward.1} parent=1 // pred_check_branch
      %20 = sbr.rel (0) target = $region21
    $region20: #{policy_forward.1} parent=1 // pred_region
      _
    $region21: #{policy_forward.1} parent=1 // pred_fallthru
      _
    %v21 = vld [vmem:[%s0] sm:$0xff]
    %v22 = vld [vmem:[%s1] sm:$0xff]
    %v23 = vld [vmem:[%s1 + $0x8] sm:$0xff]
    %v24 = vld [vmem:[%s1 + $0x10] sm:$0xff]
    %v25 = vld [vmem:[%s1 + $0x18] sm:$0xff]
    %v26 = vld [vmem:[%s2] sm:$0x1]
    %v28 = vperm.slane %v26, 0
    %vm30 = vcmask 261120
    %v32 = vsel %vm30, %v21, 0
    %34 = vmatpush.msra.mxu0 0.0
    %35 = vmatpush.msra.mxu0 0.0
    %36 = vmatpush.msra.mxu0 0.0
    %37 = vmatpush.msra.mxu0 0.0
    %38 = vmatpush.msra.mxu0 0.0
    %39 = vmatpush.msra.mxu0 0.0
    %40 = vmatpush.msra.mxu0 0.0
    %41 = vmatpush.msra.mxu0 0.0
    %42 = vmatpush.msra.mxu0 0.0
    %43 = vmatpush.msra.mxu0 0.0
    %44 = vmatpush.msra.mxu0 0.0
    %45 = vmatpush.msra.mxu0 0.0
    %46 = vmatpush.msra.mxu0 %v25
    %47 = vmatpush.msra.mxu0 %v24
    %48 = vmatpush.msra.mxu0 %v23
    %49 = vmatpush.msra.mxu0 %v22
    %50 = vmatmul.f32.gmra.mxu0 %v32
    %v51 = vpop.f32.mrf.mxu0
    %v52 = vadd.f32 %v28, %v51
    %53 = vdwg.mxu0
    %v54 = vmax.f32 %v52, 0.0
    %v55 = vld [vmem:[%s3] sm:$0xff]
    %v56 = vld [vmem:[%s3 + $0x8] sm:$0xff]
    %v57 = vld [vmem:[%s3 + $0x10] sm:$0xff]
    %v58 = vld [vmem:[%s3 + $0x18] sm:$0xff]
    %v59 = vld [vmem:[%s3 + $0x20] sm:$0xff]
    %v60 = vld [vmem:[%s3 + $0x28] sm:$0xff]
    %v61 = vld [vmem:[%s3 + $0x30] sm:$0xff]
    %v62 = vld [vmem:[%s3 + $0x38] sm:$0xff]
    %v63 = vld [vmem:[%s3 + $0x40] sm:$0xff]
    %v64 = vld [vmem:[%s3 + $0x48] sm:$0xff]
    %v65 = vld [vmem:[%s3 + $0x50] sm:$0xff]
    %v66 = vld [vmem:[%s3 + $0x58] sm:$0xff]
    %v67 = vld [vmem:[%s3 + $0x60] sm:$0xff]
    %v68 = vld [vmem:[%s3 + $0x68] sm:$0xff]
    %v69 = vld [vmem:[%s3 + $0x70] sm:$0xff]
    %v70 = vld [vmem:[%s3 + $0x78] sm:$0xff]
    %v71 = vld [vmem:[%s4] sm:$0x1]
    %v73 = vperm.slane %v71, 0
    %75 = vmatpush.msra.mxu0 %v70
    %76 = vmatpush.msra.mxu0 %v69
    %77 = vmatpush.msra.mxu0 %v68
    %78 = vmatpush.msra.mxu0 %v67
    %79 = vmatpush.msra.mxu0 %v66
    %80 = vmatpush.msra.mxu0 %v65
    %81 = vmatpush.msra.mxu0 %v64
    %82 = vmatpush.msra.mxu0 %v63
    %83 = vmatpush.msra.mxu0 %v62
    %84 = vmatpush.msra.mxu0 %v61
    %85 = vmatpush.msra.mxu0 %v60
    %86 = vmatpush.msra.mxu0 %v59
    %87 = vmatpush.msra.mxu0 %v58
    %88 = vmatpush.msra.mxu0 %v57
    %89 = vmatpush.msra.mxu0 %v56
    %90 = vmatpush.msra.mxu0 %v55
    %91 = vmatmul.f32.gmra.mxu0 %v54
    %v92 = vpop.f32.mrf.mxu0
    %v93 = vadd.f32 %v73, %v92
    %94 = vdwg.mxu0
    %vm95 = vcmask 130048
    %96 = vst.msk [vmem:[#allocation2] sm:$0xff] %vm95, %v93
    // Predicated region
    $region22: #{policy_forward.1} parent=1 // pred_check
      _
    $region23: #{policy_forward.1} parent=1 // pred_check_branch
      %98 = sbr.rel (0) target = $region25
    $region24: #{policy_forward.1} parent=1 // pred_region
      %100 = vsyncadd [#allocation3], 0
      %s102 = sshll.u32 [#allocation2], 4
      %s103 = int_to_ptr.vmem [resolvable:$true] %s102
      %s104 = sshll.u32 %s5, 4
      %s105 = int_to_ptr.hbm [resolvable:$true] %s104
      %107 = dma.vmem_to_hbm [thread:$0]  %s103, 128, %s105, [#allocation3]
    $region25: #{policy_forward.1} parent=1 // pred_fallthru
      _
    // Predicated region
    $region26: #{policy_forward.1} parent=1 // pred_check
      _
    $region27: #{policy_forward.1} parent=1 // pred_check_branch
      %109 = sbr.rel (0) target = $region29
    $region28: #{policy_forward.1} parent=1 // pred_region
      %111 = dma.done [#allocation3], 128
    $region29: #{policy_forward.1} parent=1 // pred_fallthru
      _
    %112 = vsyncpa [#allocation3], 1

</llo_original>
